<compile_context>
chip_gen: v5e
topology: v5e:2x2
jax: 0.10.0
libtpu: 0.0.40
codegen_flags: <defaults>
</compile_context>

<pallas_src>
import jax
import jax.numpy as jnp
from jax.experimental import pallas as pl
from jax.experimental.pallas import tpu as pltpu


def _round_up(a, b):
    return ((a + b - 1) // b) * b


def connection_kernel(x_ref, w_ref, o_ref, acc_ref):
    k = pl.program_id(1)  # reduction (F) tile index

    @pl.when(k == 0)
    def _():
        acc_ref[...] = jnp.zeros_like(acc_ref)

    # (1, TK) @ (TK, TN) on the MXU; accumulate in f32 regardless of w dtype.
    acc_ref[...] += jnp.dot(
        x_ref[...],
        w_ref[...].astype(jnp.float32),
        preferred_element_type=jnp.float32,
    )

    @pl.when(k == pl.num_programs(1) - 1)
    def _():
        o_ref[...] = acc_ref[...].astype(o_ref.dtype)


def connection_forward(x, weights, to_shape, *, tn=256, tk=512,
                       w_dtype=jnp.bfloat16):
    """x: any shape with prod == F; weights: (F, T). Returns `to_shape` array."""
    F, T = weights.shape

    # Clamp tile sizes to the lane-dense (128-aligned) padded problem size.
    tk = min(tk, _round_up(F, 128))
    tn = min(tn, _round_up(T, 128))
    F_pad = _round_up(F, tk)
    T_pad = _round_up(T, tn)

    x2d = x.reshape(1, F).astype(jnp.float32)
    if F_pad != F:
        x2d = jnp.pad(x2d, ((0, 0), (0, F_pad - F)))
    w = weights
    if (F_pad != F) or (T_pad != T):
        w = jnp.pad(w, ((0, F_pad - F), (0, T_pad - T)))
    w = w.astype(w_dtype)

    grid = (T_pad // tn, F_pad // tk)  # (output-column tiles, reduction tiles)
    w_itemsize = jnp.dtype(w_dtype).itemsize

    out = pl.pallas_call(
        connection_kernel,
        out_shape=jax.ShapeDtypeStruct((1, T_pad), jnp.float32),
        grid_spec=pltpu.PrefetchScalarGridSpec(
            num_scalar_prefetch=0,
            grid=grid,
            in_specs=[
                # x: tiny row vector, indexed only by the reduction step.
                pl.BlockSpec((1, tk), lambda j, k: (0, k)),
                # W: (TK, TN) tile streamed from HBM, auto double-buffered.
                pl.BlockSpec((tk, tn), lambda j, k: (k, j)),
            ],
            out_specs=pl.BlockSpec((1, tn), lambda j, k: (0, j)),
            scratch_shapes=[pltpu.VMEM((1, tn), jnp.float32)],
        ),
        compiler_params=pltpu.CompilerParams(
            dimension_semantics=("parallel", "arbitrary"),
            # Safe on all generations (<= v7x 32 MiB scoped / 64 MiB physical).
            vmem_limit_bytes=32 * 1024 * 1024,
        ),
        cost_estimate=pl.CostEstimate(
            flops=2 * F_pad * T_pad,
            transcendentals=0,
            bytes_accessed=F_pad * T_pad * w_itemsize + F_pad * 4 + T_pad * 4,
        ),
    )(x2d, w)

    return out[0, :T].reshape(to_shape)


def make_connection_params(key, from_shape=(5, 5), to_shape=(5, 5)):
    F = from_shape[0] * from_shape[1]
    T = to_shape[0] * to_shape[1]
    # torch.rand -> uniform [0, 1); then column-normalize (sum over dim=0).
    w = jax.random.uniform(key, (F, T), dtype=jnp.float32)
    w = w / jnp.sum(w, axis=0, keepdims=True)
    return w


if __name__ == "__main__":
    key = jax.random.PRNGKey(0)
    k_w1, k_x1, k_w2, k_x2 = jax.random.split(key, 4)

    # Case 1: original toy shapes (5,5)->(5,5); padded to a single lane-dense
    # 128x128 tile, f32 weights, exact check against the plain-JAX reference.
    from_shape, to_shape = (5, 5), (5, 5)
    w1 = make_connection_params(k_w1, from_shape, to_shape)
    x1 = jax.random.normal(k_x1, from_shape, dtype=jnp.float32)
    y1 = jax.block_until_ready(
        connection_forward(x1, w1, to_shape, w_dtype=jnp.float32))
    y1_ref = (x1.reshape(-1) @ w1).reshape(to_shape)
    assert y1.shape == to_shape
    assert jnp.allclose(y1, y1_ref, atol=1e-5, rtol=1e-5)

    # Case 2: larger shapes exercising the (T, F) tiling grid, the reduction
    # accumulator, and bf16 weight streaming (looser tolerance vs f32 ref).
    from_shape2, to_shape2 = (32, 32), (24, 24)   # F=1024, T=576
    w2 = make_connection_params(k_w2, from_shape2, to_shape2)
    x2 = jax.random.normal(k_x2, from_shape2, dtype=jnp.float32)
    y2 = jax.block_until_ready(
        connection_forward(x2, w2, to_shape2, w_dtype=jnp.bfloat16))
    y2_ref = (x2.reshape(-1) @ w2).reshape(to_shape2)
    assert y2.shape == to_shape2
    assert jnp.allclose(y2, y2_ref, atol=2e-2, rtol=2e-2)

    # Also sanity-check the f32 path on the larger, multi-tile problem.
    y2f = jax.block_until_ready(
        connection_forward(x2, w2, to_shape2, w_dtype=jnp.float32))
    assert jnp.allclose(y2f, y2_ref, atol=1e-4, rtol=1e-4)

    print("KERNEL_OK")
</pallas_src>

<mosaic_0001>
module attributes {stable_mosaic.version = 11 : i64} {
  func.func @connection_kernel(%arg0: i32, %arg1: i32, %arg2: memref<1x128xf32, #tpu.memory_space<vmem>>, %arg3: memref<128x128xf32, #tpu.memory_space<vmem>>, %arg4: memref<1x128xf32, #tpu.memory_space<vmem>>, %arg5: memref<1x128xf32, #tpu.memory_space<vmem>>) attributes {dimension_semantics = [#tpu.dimension_semantics<parallel>, #tpu.dimension_semantics<arbitrary>], iteration_bounds = array<i64: 1, 1>, scalar_prefetch = 0 : i64, scratch_operands = 1 : i64, tpu.core_type = #tpu.core_type<tc>, window_params = [{transform_indices = @transform_0, window_bounds = array<i64: 1, 128>}, {transform_indices = @transform_1, window_bounds = array<i64: 128, 128>}, {transform_indices = @transform_2, window_bounds = array<i64: 1, 128>}]} {
    %c0_i32 = arith.constant 0 : i32
    %0 = arith.cmpi eq, %arg1, %c0_i32 : i32
    %1 = arith.extui %0 : i1 to i32
    %c0_i32_0 = arith.constant 0 : i32
    %2 = arith.cmpi ne, %1, %c0_i32_0 : i32
    scf.if %2 {
      %cst_10 = arith.constant 0.000000e+00 : f32
      %12 = vector.broadcast %cst_10 : f32 to vector<1x128xf32>
      %c0_11 = arith.constant 0 : index
      %c0_12 = arith.constant 0 : index
      %13 = vector.load %arg5[%c0_11, %c0_12] : memref<1x128xf32, #tpu.memory_space<vmem>>, vector<1x128xf32>
      tpu.vector_store %arg5[%c0_11, %c0_12], %12 {strides = array<i32>} : memref<1x128xf32, #tpu.memory_space<vmem>>, vector<1x128xf32>,
    } else {
    }
    %c0 = arith.constant 0 : index
    %c0_1 = arith.constant 0 : index
    %3 = vector.load %arg5[%c0, %c0_1] : memref<1x128xf32, #tpu.memory_space<vmem>>, vector<1x128xf32>
    %c0_2 = arith.constant 0 : index
    %c0_3 = arith.constant 0 : index
    %4 = vector.load %arg2[%c0_2, %c0_3] : memref<1x128xf32, #tpu.memory_space<vmem>>, vector<1x128xf32>
    %c0_4 = arith.constant 0 : index
    %c0_5 = arith.constant 0 : index
    %5 = vector.load %arg3[%c0_4, %c0_5] : memref<128x128xf32, #tpu.memory_space<vmem>>, vector<128x128xf32>
    %cst = arith.constant dense<0.000000e+00> : vector<1x128xf32>
    %6 = tpu.matmul %4, %5, %cst {dimension_numbers = #tpu.dot_dimension_numbers<[1], [0], [0], [1], [0, 0, 1, 1], [], []>} : vector<1x128xf32>, vector<128x128xf32>, vector<1x128xf32> -> vector<1x128xf32>
    %7 = arith.addf %3, %6 : vector<1x128xf32>
    %c0_6 = arith.constant 0 : index
    %c0_7 = arith.constant 0 : index
    %8 = vector.load %arg5[%c0_6, %c0_7] : memref<1x128xf32, #tpu.memory_space<vmem>>, vector<1x128xf32>
    tpu.vector_store %arg5[%c0_6, %c0_7], %7 {strides = array<i32>} : memref<1x128xf32, #tpu.memory_space<vmem>>, vector<1x128xf32>,
    %c0_i32_8 = arith.constant 0 : i32
    %9 = arith.cmpi eq, %arg1, %c0_i32_8 : i32
    %10 = arith.extui %9 : i1 to i32
    %c0_i32_9 = arith.constant 0 : i32
    %11 = arith.cmpi ne, %10, %c0_i32_9 : i32
    scf.if %11 {
      %c0_10 = arith.constant 0 : index
      %c0_11 = arith.constant 0 : index
      %12 = vector.load %arg5[%c0_10, %c0_11] : memref<1x128xf32, #tpu.memory_space<vmem>>, vector<1x128xf32>
      %c0_12 = arith.constant 0 : index
      %c0_13 = arith.constant 0 : index
      %13 = vector.load %arg4[%c0_12, %c0_13] : memref<1x128xf32, #tpu.memory_space<vmem>>, vector<1x128xf32>
      tpu.vector_store %arg4[%c0_12, %c0_13], %12 {strides = array<i32>} : memref<1x128xf32, #tpu.memory_space<vmem>>, vector<1x128xf32>,
    } else {
    }
    return
  }
  func.func @transform_0(%arg0: i32, %arg1: i32) -> (i32, i32) {
    %c0_i32 = arith.constant 0 : i32
    %c0_i32_0 = arith.constant 0 : i32
    return %c0_i32, %arg1 : i32, i32
  }
  func.func @transform_1(%arg0: i32, %arg1: i32) -> (i32, i32) {
    %c0_i32 = arith.constant 0 : i32
    return %arg1, %arg0 : i32, i32
  }
  func.func @transform_2(%arg0: i32, %arg1: i32) -> (i32, i32) {
    %c0_i32 = arith.constant 0 : i32
    %c0_i32_0 = arith.constant 0 : i32
    return %c0_i32, %arg0 : i32, i32
  }
}

</mosaic_0001>

<llo_original>
// kernel: tpu_custom_call.1
$region0: #{tpu_custom_call.1}
  #allocation0 [shape = 'u32[]', space=smem, size = 0x4, offset = 0x4, fixed_abs, tag = 'smem constant byte address 0x4 - core index']
  #allocation1 [shape = 'u32[72,128]{1,0:T(1,128)}', space=vmem, size = 0x9000, scoped, tag = 'internal scratch']
  #allocation2 [shape = 'f32[1,128]{1,0:T(1,128)}', space=vmem, size = 0x200, scoped, tag = 'scratch operand']
  %s0 = inlined_call_operand.hbm [shape: f32[1,128], index: 0, kind: input, shape index: {}]
  %s1 = inlined_call_operand.hbm [shape: f32[128,128], index: 1, kind: input, shape index: {}]
  %s2 = inlined_call_operand.hbm [shape: f32[1,128], index: 2, kind: output, shape index: {}]
  %s3 = sld [smem:[#allocation0]]
  $region34: #{tpu_custom_call.1} parent=0
    _
  %s5 = ssub.s32 1, %s3
  %s6 = scalar_select 0, %s5, %s3
  $region1: #{tpu_custom_call.1} parent=0
    #allocation3 [shape = 'u8[512]{0}', space=vmem, size = 0x400, scoped, tag = 'input window, operand 0, single buffered']
    #allocation4 [shape = 's32[1]{0}', space=sflag, size = 0x4, scoped, tag = 'scoped memory for tpu_custom_call.1']
    #allocation5 [shape = 's32[1]{0}', space=sflag, size = 0x4, scoped, tag = 'scoped memory for tpu_custom_call.1']
    #allocation6 [shape = 'u8[65536]{0}', space=vmem, size = 0x10000, scoped, tag = 'input window, operand 1, single buffered']
    #allocation7 [shape = 's32[1]{0}', space=sflag, size = 0x4, scoped, tag = 'scoped memory for tpu_custom_call.1']
    #allocation8 [shape = 'u8[512]{0}', space=vmem, size = 0x400, scoped, tag = 'output window, operand 0, single buffered']
    %7 = vsyncpa [#allocation4], 0
    %8 = vsyncpa [#allocation7], 0
    %9 = vsyncpa [#allocation5], 0
    // Predicated region
    $region2: #{tpu_custom_call.1} parent=1 // pred_check
      _
    $region3: #{tpu_custom_call.1} parent=1 // pred_check_branch
      %11 = sbr.rel (0) target = $region5
    $region4: #{tpu_custom_call.1} parent=1 // pred_region
      %13 = vsyncadd [#allocation4], 0
      %s15 = sshll.u32 %s0, 4
      %s16 = int_to_ptr.hbm [resolvable:$true] %s15
      %s17 = sshll.u32 [#allocation3], 4
      %s18 = int_to_ptr.vmem [resolvable:$true] %s17
      %20 = dma.hbm_to_vmem [thread:$0]  %s16, 16, %s18, [#allocation4]
    $region5: #{tpu_custom_call.1} parent=1 // pred_fallthru
      _
    // Predicated region
    $region6: #{tpu_custom_call.1} parent=1 // pred_check
      _
    $region7: #{tpu_custom_call.1} parent=1 // pred_check_branch
      %22 = sbr.rel (0) target = $region9
    $region8: #{tpu_custom_call.1} parent=1 // pred_region
      %24 = vsyncadd [#allocation7], 0
      %s25 = sshll.u32 %s1, 4
      %s26 = int_to_ptr.hbm [resolvable:$true] %s25
      %s27 = sshll.u32 [#allocation6], 4
      %s28 = int_to_ptr.vmem [resolvable:$true] %s27
      %33 = dma.hbm_to_vmem [thread:$0]  %s26, 2048, %s28, [#allocation7], 128, 128, 8
    $region9: #{tpu_custom_call.1} parent=1 // pred_fallthru
      _
    // Predicated region
    $region10: #{tpu_custom_call.1} parent=1 // pred_check
      _
    $region11: #{tpu_custom_call.1} parent=1 // pred_check_branch
      %35 = sbr.rel (0) target = $region13
    $region12: #{tpu_custom_call.1} parent=1 // pred_region
      %37 = dma.done [#allocation4], 16
    $region13: #{tpu_custom_call.1} parent=1 // pred_fallthru
      _
    // Predicated region
    $region14: #{tpu_custom_call.1} parent=1 // pred_check
      _
    $region15: #{tpu_custom_call.1} parent=1 // pred_check_branch
      %39 = sbr.rel (0) target = $region17
    $region16: #{tpu_custom_call.1} parent=1 // pred_region
      %41 = dma.done [#allocation7], 2048
    $region17: #{tpu_custom_call.1} parent=1 // pred_fallthru
      _
    %p42 = scmp.eq.s32.totalorder 0, 0
    // Predicated region
    $region18: #{tpu_custom_call.1} parent=1 // pred_check
      %p43 = pneg %p42
    $region19: #{tpu_custom_call.1} parent=1 // pred_check_branch
      %45 = sbr.rel (%p43) target = $region21
    $region20: #{tpu_custom_call.1} parent=1 // pred_region
      %46 = vst [vmem:[#allocation2] sm:$0x1] 0.0
    $region21: #{tpu_custom_call.1} parent=1 // pred_fallthru
      _
    %v47 = vld [vmem:[#allocation2] sm:$0x1]
    %v48 = vld [vmem:[#allocation3] sm:$0x1]
    %v49 = vld [vmem:[#allocation6] sm:$0xff]
    %v50 = vld [vmem:[#allocation6 + $0x8] sm:$0xff]
    %v51 = vld [vmem:[#allocation6 + $0x10] sm:$0xff]
    %v52 = vld [vmem:[#allocation6 + $0x18] sm:$0xff]
    %v53 = vld [vmem:[#allocation6 + $0x20] sm:$0xff]
    %v54 = vld [vmem:[#allocation6 + $0x28] sm:$0xff]
    %v55 = vld [vmem:[#allocation6 + $0x30] sm:$0xff]
    %v56 = vld [vmem:[#allocation6 + $0x38] sm:$0xff]
    %v57 = vld [vmem:[#allocation6 + $0x40] sm:$0xff]
    %v58 = vld [vmem:[#allocation6 + $0x48] sm:$0xff]
    %v59 = vld [vmem:[#allocation6 + $0x50] sm:$0xff]
    %v60 = vld [vmem:[#allocation6 + $0x58] sm:$0xff]
    %v61 = vld [vmem:[#allocation6 + $0x60] sm:$0xff]
    %v62 = vld [vmem:[#allocation6 + $0x68] sm:$0xff]
    %v63 = vld [vmem:[#allocation6 + $0x70] sm:$0xff]
    %v64 = vld [vmem:[#allocation6 + $0x78] sm:$0xff]
    %65 = vmatpush.msra.mxu0 %v64
    %66 = vmatpush.msra.mxu0 %v63
    %67 = vmatpush.msra.mxu0 %v62
    %68 = vmatpush.msra.mxu0 %v61
    %69 = vmatpush.msra.mxu0 %v60
    %70 = vmatpush.msra.mxu0 %v59
    %71 = vmatpush.msra.mxu0 %v58
    %72 = vmatpush.msra.mxu0 %v57
    %73 = vmatpush.msra.mxu0 %v56
    %74 = vmatpush.msra.mxu0 %v55
    %75 = vmatpush.msra.mxu0 %v54
    %76 = vmatpush.msra.mxu0 %v53
    %77 = vmatpush.msra.mxu0 %v52
    %78 = vmatpush.msra.mxu0 %v51
    %79 = vmatpush.msra.mxu0 %v50
    %80 = vmatpush.msra.mxu0 %v49
    %81 = vmatmul.f32.gmra.mxu0 %v48
    %v82 = vpop.f32.mrf.mxu0
    %v83 = vadd.f32 0.0, %v82
    %84 = vdwg.mxu0
    %v85 = vadd.f32 %v47, %v83
    %86 = vst [vmem:[#allocation2] sm:$0x1] %v85
    // Predicated region
    $region22: #{tpu_custom_call.1} parent=1 // pred_check
      %p87 = pneg %p42
    $region23: #{tpu_custom_call.1} parent=1 // pred_check_branch
      %89 = sbr.rel (%p87) target = $region25
    $region24: #{tpu_custom_call.1} parent=1 // pred_region
      %v90 = vld [vmem:[#allocation2] sm:$0x1]
      %91 = vst [vmem:[#allocation8] sm:$0x1] %v90
    $region25: #{tpu_custom_call.1} parent=1 // pred_fallthru
      _
    // Predicated region
    $region26: #{tpu_custom_call.1} parent=1 // pred_check
      _
    $region27: #{tpu_custom_call.1} parent=1 // pred_check_branch
      %93 = sbr.rel (0) target = $region29
    $region28: #{tpu_custom_call.1} parent=1 // pred_region
      %95 = vsyncadd [#allocation5], 0
      %s97 = sshll.u32 [#allocation8], 4
      %s98 = int_to_ptr.vmem [resolvable:$true] %s97
      %s99 = sshll.u32 %s2, 4
      %s100 = int_to_ptr.hbm [resolvable:$true] %s99
      %102 = dma.vmem_to_hbm [thread:$0]  %s98, 16, %s100, [#allocation5]
    $region29: #{tpu_custom_call.1} parent=1 // pred_fallthru
      _
    // Predicated region
    $region30: #{tpu_custom_call.1} parent=1 // pred_check
      _
    $region31: #{tpu_custom_call.1} parent=1 // pred_check_branch
      %104 = sbr.rel (0) target = $region33
    $region32: #{tpu_custom_call.1} parent=1 // pred_region
      %106 = dma.done [#allocation5], 16
    $region33: #{tpu_custom_call.1} parent=1 // pred_fallthru
      _
    %107 = vsyncpa [#allocation4], 1
    %108 = vsyncpa [#allocation7], 1
    %109 = vsyncpa [#allocation5], 1

</llo_original>
